<compile_context>
chip_gen: v6e
topology: v6e:2x2x1
jax: 0.10.0
libtpu: 0.0.40
codegen_flags: <defaults>
</compile_context>

<pallas_src>
import jax
import jax.numpy as jnp
from jax.experimental import pallas as pl
from jax.experimental.pallas import tpu as pltpu


def _round_up(x: int, m: int) -> int:
    return (x + m - 1) // m * m


def _cdiv(a: int, b: int) -> int:
    return (a + b - 1) // b


def _vmem_capacity_bytes() -> int:
    """Best-effort query of per-core VMEM; fall back to the smallest (v7x, 64 MiB)."""
    try:
        info = pltpu.get_tpu_info()
        cap = getattr(info, "vmem_capacity_bytes", None)
        if cap:
            return int(cap)
    except Exception:
        pass
    return 64 * 1024 * 1024


def aggregator_kernel(self_ref, neigh_ref, w_self_ref, w_neigh_ref, out_ref):
    # self_ref : (TN, Cs)     -- one row tile of self vectors
    # neigh_ref: (TN, K*Cn)   -- lane-dense flattened neighbor tile
    # w_self   : (Cs, O)      -- VMEM-resident (constant index_map)
    # w_neigh  : (K*Cn, O)    -- VMEM-resident, pre-scaled by 1/K (mean folded in)
    # out_ref  : (TN, O)
    out = jnp.dot(self_ref[...].astype(jnp.float32), w_self_ref[...],
                  preferred_element_type=jnp.float32)
    out = out + jnp.dot(neigh_ref[...].astype(jnp.float32), w_neigh_ref[...],
                        preferred_element_type=jnp.float32)
    # concat=False -> sum; bias=None; act=ReLU
    out_ref[...] = jnp.maximum(out, 0.0).astype(out_ref.dtype)


def aggregator_forward(self_vecs, neigh_vecs, self_weight, neigh_weight, *, tile_n=None):
    N, Cs = self_vecs.shape
    Nn, K, Cn = neigh_vecs.shape
    assert Nn == N
    Cs_w, O = self_weight.shape
    assert Cs_w == Cs and neigh_weight.shape == (Cn, O)

    out_dtype = self_vecs.dtype
    itemsize = jnp.dtype(out_dtype).itemsize
    KCn = K * Cn

    # ---- layout / weight prep in the wrapper (no input padding, no output slice) ---
    # Lane-dense neighbor tensor via a contiguous reshape.
    neigh2d = neigh_vecs.reshape(N, KCn)
    # Fold the 1/K mean into a K-replicated neighbor weight: a single deep MXU
    # contraction replaces the per-neighbor lane-slice accumulation loop.
    w_self_f32 = self_weight.astype(jnp.float32)
    w_neigh_big = jnp.tile(neigh_weight.astype(jnp.float32), (K, 1)) * (1.0 / K)

    # ---- row-tile size, sized against (double-buffered) VMEM usage -----------------
    vmem_cap = _vmem_capacity_bytes()
    row_bytes = (Cs + KCn + O) * 4          # per-row VMEM bytes (f32-conservative)
    if tile_n is None:
        tn = (vmem_cap // 3) // (2 * row_bytes)  # ~1/3 of VMEM for double-buffered tiles
        tn = max(8, min(2048, tn))               # raised cap: amortize per-step overhead
        # v7x megacore: keep >= 4 grid steps when N allows so the "parallel" axis
        # can be sharded across both TensorCores (v5e/v6e are single-TC, harmless).
        tn_quarter = _round_up(_cdiv(N, 4), 8)
        if tn_quarter >= 256:
            tn = min(tn, tn_quarter)
    else:
        tn = max(8, tile_n)
    tn = max(8, (tn // 8) * 8)
    tn = min(tn, _round_up(N, 8))
    grid = (_cdiv(N, tn),)                  # ragged last block handled by Pallas masking

    weights_bytes = (Cs + KCn) * O * 4
    needed = 2 * tn * row_bytes + weights_bytes + (4 << 20)
    vmem_limit = int(min(vmem_cap * 3 // 4, max(needed, 16 << 20)))

    cost = pl.CostEstimate(
        flops=2 * N * (Cs + KCn) * O,
        transcendentals=0,
        bytes_accessed=itemsize * N * (Cs + KCn + O) + 4 * (Cs + KCn) * O,
    )

    out = pl.pallas_call(
        aggregator_kernel,
        out_shape=jax.ShapeDtypeStruct((N, O), out_dtype),
        grid=grid,
        in_specs=[
            pl.BlockSpec((tn, Cs), lambda i: (i, 0)),
            pl.BlockSpec((tn, KCn), lambda i: (i, 0)),
            pl.BlockSpec((Cs, O), lambda i: (0, 0)),     # VMEM-resident weight
            pl.BlockSpec((KCn, O), lambda i: (0, 0)),    # VMEM-resident weight
        ],
        out_specs=pl.BlockSpec((tn, O), lambda i: (i, 0)),
        compiler_params=pltpu.CompilerParams(
            dimension_semantics=("parallel",),
            vmem_limit_bytes=vmem_limit,
        ),
        cost_estimate=cost,
    )(self_vecs, neigh2d, w_self_f32, w_neigh_big)

    return out


def xavier_normal(key, fan_in, fan_out, dtype=jnp.float32):
    # torch.nn.init.xavier_normal_: std = gain * sqrt(2 / (fan_in + fan_out)), gain=1
    std = (2.0 / (fan_in + fan_out)) ** 0.5
    return std * jax.random.normal(key, (fan_in, fan_out), dtype=dtype)


def reference_forward(self_vecs, neigh_vecs, self_weight, neigh_weight):
    neigh_mean = jnp.mean(neigh_vecs.astype(jnp.float32), axis=1)
    out = (self_vecs.astype(jnp.float32) @ self_weight.astype(jnp.float32)
           + neigh_mean @ neigh_weight.astype(jnp.float32))
    return jnp.maximum(out, 0.0).astype(self_vecs.dtype)


if __name__ == "__main__":
    # Small deterministic example shapes consistent with the module.
    N = 20             # number of nodes (not a multiple of 8 -> exercises ragged last block)
    K = 8              # neighbors per node
    SELF_C = 32        # self_channels
    NEIGH_C = 32       # neigh_channels
    OUT_C = 32         # out_channels

    key = jax.random.PRNGKey(0)
    k1, k2, k3, k4 = jax.random.split(key, 4)

    self_vecs = jax.random.normal(k1, (N, SELF_C), dtype=jnp.float32)
    neigh_vecs = jax.random.normal(k2, (N, K, NEIGH_C), dtype=jnp.float32)

    # Deterministic parameter init (xavier_normal, matching __init__).
    self_weight = xavier_normal(k3, SELF_C, OUT_C)
    neigh_weight = xavier_normal(k4, NEIGH_C, OUT_C)

    ref = reference_forward(self_vecs, neigh_vecs, self_weight, neigh_weight)

    # 1) default (auto tile): whole problem in one grid step.
    out = aggregator_forward(self_vecs, neigh_vecs, self_weight, neigh_weight)
    out = jax.block_until_ready(out)
    assert out.shape == (N, OUT_C)
    assert jnp.allclose(out, ref, atol=1e-4, rtol=1e-5)

    # 2) forced small tile: exercises the multi-step grid + ragged-last-block path.
    out_tiled = aggregator_forward(self_vecs, neigh_vecs, self_weight, neigh_weight, tile_n=8)
    out_tiled = jax.block_until_ready(out_tiled)
    assert out_tiled.shape == (N, OUT_C)
    assert jnp.allclose(out_tiled, ref, atol=1e-4, rtol=1e-5)

    print("KERNEL_OK")
</pallas_src>

<mosaic_0001>
module attributes {stable_mosaic.version = 11 : i64} {
  func.func @aggregator_kernel(%arg0: i32, %arg1: memref<24x32xf32, #tpu.memory_space<vmem>>, %arg2: memref<24x256xf32, #tpu.memory_space<vmem>>, %arg3: memref<32x32xf32, #tpu.memory_space<vmem>>, %arg4: memref<256x32xf32, #tpu.memory_space<vmem>>, %arg5: memref<24x32xf32, #tpu.memory_space<vmem>>) attributes {dimension_semantics = [#tpu.dimension_semantics<parallel>], iteration_bounds = array<i64: 1>, scalar_prefetch = 0 : i64, scratch_operands = 0 : i64, tpu.core_type = #tpu.core_type<tc>, window_params = [{transform_indices = @transform_0, window_bounds = array<i64: 24, 32>}, {transform_indices = @transform_1, window_bounds = array<i64: 24, 256>}, {pipeline_mode = #tpu.pipeline_mode<synchronous>, transform_indices = @transform_2, window_bounds = array<i64: 32, 32>}, {pipeline_mode = #tpu.pipeline_mode<synchronous>, transform_indices = @transform_3, window_bounds = array<i64: 256, 32>}, {transform_indices = @transform_4, window_bounds = array<i64: 24, 32>}]} {
    %c0 = arith.constant 0 : index
    %c0_0 = arith.constant 0 : index
    %0 = vector.load %arg1[%c0, %c0_0] : memref<24x32xf32, #tpu.memory_space<vmem>>, vector<24x32xf32>
    %c0_1 = arith.constant 0 : index
    %c0_2 = arith.constant 0 : index
    %1 = vector.load %arg3[%c0_1, %c0_2] : memref<32x32xf32, #tpu.memory_space<vmem>>, vector<32x32xf32>
    %cst = arith.constant dense<0.000000e+00> : vector<24x32xf32>
    %2 = tpu.matmul %0, %1, %cst {dimension_numbers = #tpu.dot_dimension_numbers<[1], [0], [0], [1], [0, 0, 1, 1], [], []>} : vector<24x32xf32>, vector<32x32xf32>, vector<24x32xf32> -> vector<24x32xf32>
    %c0_3 = arith.constant 0 : index
    %c0_4 = arith.constant 0 : index
    %3 = vector.load %arg2[%c0_3, %c0_4] : memref<24x256xf32, #tpu.memory_space<vmem>>, vector<24x256xf32>
    %c0_5 = arith.constant 0 : index
    %c0_6 = arith.constant 0 : index
    %4 = vector.load %arg4[%c0_5, %c0_6] : memref<256x32xf32, #tpu.memory_space<vmem>>, vector<256x32xf32>
    %cst_7 = arith.constant dense<0.000000e+00> : vector<24x32xf32>
    %5 = tpu.matmul %3, %4, %cst_7 {dimension_numbers = #tpu.dot_dimension_numbers<[1], [0], [0], [1], [0, 0, 1, 1], [], []>} : vector<24x256xf32>, vector<256x32xf32>, vector<24x32xf32> -> vector<24x32xf32>
    %6 = arith.addf %2, %5 : vector<24x32xf32>
    %cst_8 = arith.constant 0.000000e+00 : f32
    %7 = vector.broadcast %cst_8 : f32 to vector<24x32xf32>
    %8 = arith.maximumf %6, %7 : vector<24x32xf32>
    %c0_9 = arith.constant 0 : index
    %c0_10 = arith.constant 0 : index
    %9 = vector.load %arg5[%c0_9, %c0_10] : memref<24x32xf32, #tpu.memory_space<vmem>>, vector<24x32xf32>
    tpu.vector_store %arg5[%c0_9, %c0_10], %8 {strides = array<i32>} : memref<24x32xf32, #tpu.memory_space<vmem>>, vector<24x32xf32>,
    return
  }
  func.func @transform_0(%arg0: i32) -> (i32, i32) {
    %c0_i32 = arith.constant 0 : i32
    %c0_i32_0 = arith.constant 0 : i32
    return %arg0, %c0_i32 : i32, i32
  }
  func.func @transform_1(%arg0: i32) -> (i32, i32) {
    %c0_i32 = arith.constant 0 : i32
    %c0_i32_0 = arith.constant 0 : i32
    return %arg0, %c0_i32 : i32, i32
  }
  func.func @transform_2(%arg0: i32) -> (i32, i32) {
    %c0_i32 = arith.constant 0 : i32
    %c0_i32_0 = arith.constant 0 : i32
    %c0_i32_1 = arith.constant 0 : i32
    return %c0_i32, %c0_i32_0 : i32, i32
  }
  func.func @transform_3(%arg0: i32) -> (i32, i32) {
    %c0_i32 = arith.constant 0 : i32
    %c0_i32_0 = arith.constant 0 : i32
    %c0_i32_1 = arith.constant 0 : i32
    return %c0_i32, %c0_i32_0 : i32, i32
  }
  func.func @transform_4(%arg0: i32) -> (i32, i32) {
    %c0_i32 = arith.constant 0 : i32
    %c0_i32_0 = arith.constant 0 : i32
    return %arg0, %c0_i32 : i32, i32
  }
}

</mosaic_0001>

<llo_original>
// kernel: tpu_custom_call.1
$region0: #{tpu_custom_call.1}
  #allocation0 [shape = 'u32[]', space=smem, size = 0x4, offset = 0x4, fixed_abs, tag = 'smem constant byte address 0x4 - core index']
  #allocation1 [shape = 'u32[144,128]{1,0:T(1,128)}', space=vmem, size = 0x12000, scoped, tag = 'internal scratch']
  %s0 = inlined_call_operand.vmem [shape: f32[20,32], index: 0, kind: input, shape index: {}]
  %s1 = inlined_call_operand.vmem [shape: f32[20,256], index: 1, kind: input, shape index: {}]
  %s2 = inlined_call_operand.vmem [shape: f32[32,32], index: 2, kind: input, shape index: {}]
  %s3 = inlined_call_operand.vmem [shape: f32[256,32], index: 3, kind: input, shape index: {}]
  %s4 = inlined_call_operand.hbm [shape: f32[20,32], index: 4, kind: output, shape index: {}]
  %s5 = sld [smem:[#allocation0]]
  $region26: #{tpu_custom_call.1} parent=0
    _
  %s7 = ssub.s32 1, %s5
  %s8 = scalar_select 0, %s7, %s5
  $region1: #{tpu_custom_call.1} parent=0
    #allocation2 [shape = 'u8[12288]{0}', space=vmem, size = 0x3000, scoped, tag = 'output window, operand 0, single buffered']
    #allocation3 [shape = 's32[1]{0}', space=sflag, size = 0x4, scoped, tag = 'scoped memory for tpu_custom_call.1']
    %9 = vsyncpa [#allocation3], 0
    // Predicated region
    $region2: #{tpu_custom_call.1} parent=1 // pred_check
      _
    $region3: #{tpu_custom_call.1} parent=1 // pred_check_branch
      %11 = sbr.rel (0) target = $region5
    $region4: #{tpu_custom_call.1} parent=1 // pred_region
      _
    $region5: #{tpu_custom_call.1} parent=1 // pred_fallthru
      _
    // Predicated region
    $region6: #{tpu_custom_call.1} parent=1 // pred_check
      _
    $region7: #{tpu_custom_call.1} parent=1 // pred_check_branch
      %13 = sbr.rel (0) target = $region9
    $region8: #{tpu_custom_call.1} parent=1 // pred_region
      _
    $region9: #{tpu_custom_call.1} parent=1 // pred_fallthru
      _
    // Predicated region
    $region10: #{tpu_custom_call.1} parent=1 // pred_check
      _
    $region11: #{tpu_custom_call.1} parent=1 // pred_check_branch
      %15 = sbr.rel (0) target = $region13
    $region12: #{tpu_custom_call.1} parent=1 // pred_region
      _
    $region13: #{tpu_custom_call.1} parent=1 // pred_fallthru
      _
    // Predicated region
    $region14: #{tpu_custom_call.1} parent=1 // pred_check
      _
    $region15: #{tpu_custom_call.1} parent=1 // pred_check_branch
      %17 = sbr.rel (0) target = $region17
    $region16: #{tpu_custom_call.1} parent=1 // pred_region
      _
    $region17: #{tpu_custom_call.1} parent=1 // pred_fallthru
      _
    %v18 = vld [vmem:[%s0] sm:$0xff]
    %v19 = vld [vmem:[%s0 + $0x8] sm:$0xff]
    %v20 = vld [vmem:[%s0 + $0x10] sm:$0xff]
    %v21 = vld [vmem:[%s2] sm:$0xff]
    %v22 = vld [vmem:[%s2 + $0x8] sm:$0xff]
    %v23 = vld [vmem:[%s2 + $0x10] sm:$0xff]
    %v24 = vld [vmem:[%s2 + $0x18] sm:$0xff]
    %v25 = vld [vmem:[%s1] sm:$0xff]
    %v26 = vld [vmem:[%s1 + $0x8] sm:$0xff]
    %v27 = vld [vmem:[%s1 + $0x10] sm:$0xff]
    %v28 = vld [vmem:[%s1 + $0x18] sm:$0xff]
    %v29 = vld [vmem:[%s1 + $0x20] sm:$0xff]
    %v30 = vld [vmem:[%s1 + $0x28] sm:$0xff]
    %v31 = vld [vmem:[%s3] sm:$0xff]
    %v32 = vld [vmem:[%s3 + $0x8] sm:$0xff]
    %v33 = vld [vmem:[%s3 + $0x10] sm:$0xff]
    %v34 = vld [vmem:[%s3 + $0x18] sm:$0xff]
    %v35 = vld [vmem:[%s3 + $0x20] sm:$0xff]
    %v36 = vld [vmem:[%s3 + $0x28] sm:$0xff]
    %v37 = vld [vmem:[%s3 + $0x30] sm:$0xff]
    %v38 = vld [vmem:[%s3 + $0x38] sm:$0xff]
    %v39 = vld [vmem:[%s3 + $0x40] sm:$0xff]
    %v40 = vld [vmem:[%s3 + $0x48] sm:$0xff]
    %v41 = vld [vmem:[%s3 + $0x50] sm:$0xff]
    %v42 = vld [vmem:[%s3 + $0x58] sm:$0xff]
    %v43 = vld [vmem:[%s3 + $0x60] sm:$0xff]
    %v44 = vld [vmem:[%s3 + $0x68] sm:$0xff]
    %v45 = vld [vmem:[%s3 + $0x70] sm:$0xff]
    %v46 = vld [vmem:[%s3 + $0x78] sm:$0xff]
    %v47 = vld [vmem:[%s3 + $0x80] sm:$0xff]
    %v48 = vld [vmem:[%s3 + $0x88] sm:$0xff]
    %v49 = vld [vmem:[%s3 + $0x90] sm:$0xff]
    %v50 = vld [vmem:[%s3 + $0x98] sm:$0xff]
    %v51 = vld [vmem:[%s3 + $0xa0] sm:$0xff]
    %v52 = vld [vmem:[%s3 + $0xa8] sm:$0xff]
    %v53 = vld [vmem:[%s3 + $0xb0] sm:$0xff]
    %v54 = vld [vmem:[%s3 + $0xb8] sm:$0xff]
    %v55 = vld [vmem:[%s3 + $0xc0] sm:$0xff]
    %v56 = vld [vmem:[%s3 + $0xc8] sm:$0xff]
    %v57 = vld [vmem:[%s3 + $0xd0] sm:$0xff]
    %v58 = vld [vmem:[%s3 + $0xd8] sm:$0xff]
    %v59 = vld [vmem:[%s3 + $0xe0] sm:$0xff]
    %v60 = vld [vmem:[%s3 + $0xe8] sm:$0xff]
    %v61 = vld [vmem:[%s3 + $0xf0] sm:$0xff]
    %v62 = vld [vmem:[%s3 + $0xf8] sm:$0xff]
    %63 = vmatprep.subr.mxu0 0.0
    %64 = vmatpush1.msra.mxu0 %v46
    %65 = vmatprep.subr.mxu0 0.0
    %66 = vmatpush1.msra.mxu0 %v45
    %67 = vmatprep.subr.mxu0 0.0
    %68 = vmatpush1.msra.mxu0 %v44
    %69 = vmatprep.subr.mxu0 0.0
    %70 = vmatpush1.msra.mxu0 %v43
    %71 = vmatprep.subr.mxu0 0.0
    %72 = vmatpush1.msra.mxu0 %v42
    %73 = vmatprep.subr.mxu0 0.0
    %74 = vmatpush1.msra.mxu0 %v41
    %75 = vmatprep.subr.mxu0 0.0
    %76 = vmatpush1.msra.mxu0 %v40
    %77 = vmatprep.subr.mxu0 0.0
    %78 = vmatpush1.msra.mxu0 %v39
    %79 = vmatprep.subr.mxu0 0.0
    %80 = vmatpush1.msra.mxu0 %v38
    %81 = vmatprep.subr.mxu0 0.0
    %82 = vmatpush1.msra.mxu0 %v37
    %83 = vmatprep.subr.mxu0 0.0
    %84 = vmatpush1.msra.mxu0 %v36
    %85 = vmatprep.subr.mxu0 0.0
    %86 = vmatpush1.msra.mxu0 %v35
    %87 = vmatprep.subr.mxu0 0.0
    %88 = vmatpush1.msra.mxu0 %v34
    %89 = vmatprep.subr.mxu0 0.0
    %90 = vmatpush1.msra.mxu0 %v33
    %91 = vmatprep.subr.mxu0 0.0
    %92 = vmatpush1.msra.mxu0 %v32
    %93 = vmatprep.subr.mxu0 0.0
    %94 = vmatpush1.msra.mxu0 %v31
    %95 = vmatprep.subr.mxu0 0.0
    %96 = vmatpush2.msra.mxu0 %v62
    %97 = vmatprep.subr.mxu0 0.0
    %98 = vmatpush2.msra.mxu0 %v61
    %99 = vmatprep.subr.mxu0 0.0
    %100 = vmatpush2.msra.mxu0 %v60
    %101 = vmatprep.subr.mxu0 0.0
    %102 = vmatpush2.msra.mxu0 %v59
    %103 = vmatprep.subr.mxu0 0.0
    %104 = vmatpush2.msra.mxu0 %v58
    %105 = vmatprep.subr.mxu0 0.0
    %106 = vmatpush2.msra.mxu0 %v57
    %107 = vmatprep.subr.mxu0 0.0
    %108 = vmatpush2.msra.mxu0 %v56
    %109 = vmatprep.subr.mxu0 0.0
    %110 = vmatpush2.msra.mxu0 %v55
    %111 = vmatprep.subr.mxu0 0.0
    %112 = vmatpush2.msra.mxu0 %v54
    %113 = vmatprep.subr.mxu0 0.0
    %114 = vmatpush2.msra.mxu0 %v53
    %115 = vmatprep.subr.mxu0 0.0
    %116 = vmatpush2.msra.mxu0 %v52
    %117 = vmatprep.subr.mxu0 0.0
    %118 = vmatpush2.msra.mxu0 %v51
    %119 = vmatprep.subr.mxu0 0.0
    %120 = vmatpush2.msra.mxu0 %v50
    %121 = vmatprep.subr.mxu0 0.0
    %122 = vmatpush2.msra.mxu0 %v49
    %123 = vmatprep.subr.mxu0 0.0
    %124 = vmatpush2.msra.mxu0 %v48
    %125 = vmatprep.subr.mxu0 0.0
    %126 = vmatpush2.msra.mxu0 %v47
    %127 = vmatprep.mubr.f32.mxu0 %v26
    %128 = vmatmul.mubr.f32.gmra.mxu0 %v25
    %v129 = vpop.f32.mrf.mxu0
    %v130 = vadd.f32 0.0, %v129
    %v131 = vpop.f32.mrf.mxu0
    %132 = vmatprep.mubr.f32.mxu0 %v28
    %133 = vmatmul.mubr.f32.gmra.mxu0 %v27
    %v134 = vpop.f32.mrf.mxu0
    %v135 = vadd.f32 0.0, %v134
    %v136 = vpop.f32.mrf.mxu0
    %137 = vmatprep.mubr.f32.mxu0 %v30
    %138 = vmatmul.mubr.f32.gmra.mxu0 %v29
    %v139 = vpop.f32.mrf.mxu0
    %v140 = vadd.f32 0.0, %v139
    %v141 = vpop.f32.mrf.mxu0
    %142 = vdwg.mxu0
    %vm143 = vcmask 261120
    %v145 = vsel %vm143, %v18, 0
    %v148 = vsel %vm143, %v19, 0
    %v151 = vsel %vm143, %v20, 0
    %153 = vmatprep.subr.mxu0 0.0
    %154 = vmatpush1.msra.mxu0 0.0
    %155 = vmatprep.subr.mxu0 0.0
    %156 = vmatpush1.msra.mxu0 0.0
    %157 = vmatprep.subr.mxu0 0.0
    %158 = vmatpush1.msra.mxu0 0.0
    %159 = vmatprep.subr.mxu0 0.0
    %160 = vmatpush1.msra.mxu0 0.0
    %161 = vmatprep.subr.mxu0 0.0
    %162 = vmatpush1.msra.mxu0 0.0
    %163 = vmatprep.subr.mxu0 0.0
    %164 = vmatpush1.msra.mxu0 0.0
    %165 = vmatprep.subr.mxu0 0.0
    %166 = vmatpush1.msra.mxu0 0.0
    %167 = vmatprep.subr.mxu0 0.0
    %168 = vmatpush1.msra.mxu0 0.0
    %169 = vmatprep.subr.mxu0 0.0
    %170 = vmatpush1.msra.mxu0 0.0
    %171 = vmatprep.subr.mxu0 0.0
    %172 = vmatpush1.msra.mxu0 0.0
    %173 = vmatprep.subr.mxu0 0.0
    %174 = vmatpush1.msra.mxu0 0.0
    %175 = vmatprep.subr.mxu0 0.0
    %176 = vmatpush1.msra.mxu0 0.0
    %177 = vmatprep.subr.mxu0 0.0
    %178 = vmatpush1.msra.mxu0 %v24
    %179 = vmatprep.subr.mxu0 0.0
    %180 = vmatpush1.msra.mxu0 %v23
    %181 = vmatprep.subr.mxu0 0.0
    %182 = vmatpush1.msra.mxu0 %v22
    %183 = vmatprep.subr.mxu0 0.0
    %184 = vmatpush1.msra.mxu0 %v21
    %185 = vmatprep.subr.mxu0 0.0
    %186 = vmatpush2.msra.mxu0 0.0
    %187 = vmatprep.subr.mxu0 0.0
    %188 = vmatpush2.msra.mxu0 0.0
    %189 = vmatprep.subr.mxu0 0.0
    %190 = vmatpush2.msra.mxu0 0.0
    %191 = vmatprep.subr.mxu0 0.0
    %192 = vmatpush2.msra.mxu0 0.0
    %193 = vmatprep.subr.mxu0 0.0
    %194 = vmatpush2.msra.mxu0 0.0
    %195 = vmatprep.subr.mxu0 0.0
    %196 = vmatpush2.msra.mxu0 0.0
    %197 = vmatprep.subr.mxu0 0.0
    %198 = vmatpush2.msra.mxu0 0.0
    %199 = vmatprep.subr.mxu0 0.0
    %200 = vmatpush2.msra.mxu0 0.0
    %201 = vmatprep.subr.mxu0 0.0
    %202 = vmatpush2.msra.mxu0 0.0
    %203 = vmatprep.subr.mxu0 0.0
    %204 = vmatpush2.msra.mxu0 0.0
    %205 = vmatprep.subr.mxu0 0.0
    %206 = vmatpush2.msra.mxu0 0.0
    %207 = vmatprep.subr.mxu0 0.0
    %208 = vmatpush2.msra.mxu0 0.0
    %209 = vmatprep.subr.mxu0 0.0
    %210 = vmatpush2.msra.mxu0 0.0
    %211 = vmatprep.subr.mxu0 0.0
    %212 = vmatpush2.msra.mxu0 0.0
    %213 = vmatprep.subr.mxu0 0.0
    %214 = vmatpush2.msra.mxu0 0.0
    %215 = vmatprep.subr.mxu0 0.0
    %216 = vmatpush2.msra.mxu0 0.0
    %217 = vmatprep.mubr.f32.mxu0 0.0
    %218 = vmatmul.mubr.f32.gmra.mxu0 %v145
    %v219 = vpop.f32.mrf.mxu0
    %v220 = vadd.f32 %v130, %v219
    %v221 = vpop.f32.mrf.mxu0
    %222 = vmatprep.mubr.f32.mxu0 0.0
    %223 = vmatmul.mubr.f32.gmra.mxu0 %v148
    %v224 = vpop.f32.mrf.mxu0
    %v225 = vadd.f32 %v135, %v224
    %v226 = vpop.f32.mrf.mxu0
    %227 = vmatprep.mubr.f32.mxu0 0.0
    %228 = vmatmul.mubr.f32.gmra.mxu0 %v151
    %v229 = vpop.f32.mrf.mxu0
    %v230 = vadd.f32 %v140, %v229
    %v231 = vpop.f32.mrf.mxu0
    %232 = vdwg.mxu0
    %v233 = vmax.f32 %v220, 0.0
    %v234 = vmax.f32 %v225, 0.0
    %v235 = vmax.f32 %v230, 0.0
    %236 = vst.msk [vmem:[#allocation2] sm:$0xff] %vm143, %v233
    %237 = vst.msk [vmem:[#allocation2 + $0x8] sm:$0xff] %vm143, %v234
    %238 = vst.msk [vmem:[#allocation2 + $0x10] sm:$0xff] %vm143, %v235
    // Predicated region
    $region18: #{tpu_custom_call.1} parent=1 // pred_check
      _
    $region19: #{tpu_custom_call.1} parent=1 // pred_check_branch
      %240 = sbr.rel (0) target = $region21
    $region20: #{tpu_custom_call.1} parent=1 // pred_region
      %s242 = ssub.s32 384, 384
      %243 = vsyncadd [#allocation3], %s242
      %s244 = sshll.u32 [#allocation2], 4
      %s245 = int_to_ptr.vmem [resolvable:$true] %s244
      %250 = dma.vmem_to_hbm [thread:$0]  %s245, 384, %s4, [#allocation3], 128, 128, 8
    $region21: #{tpu_custom_call.1} parent=1 // pred_fallthru
      _
    // Predicated region
    $region22: #{tpu_custom_call.1} parent=1 // pred_check
      _
    $region23: #{tpu_custom_call.1} parent=1 // pred_check_branch
      %252 = sbr.rel (0) target = $region25
    $region24: #{tpu_custom_call.1} parent=1 // pred_region
      %253 = dma.done [#allocation3], 384
    $region25: #{tpu_custom_call.1} parent=1 // pred_fallthru
      _
    %254 = vsyncpa [#allocation3], 1

</llo_original>
